<compile_context>
chip_gen: v5e
topology: v5e:2x2
jax: 0.10.0
libtpu: 0.0.40
codegen_flags: <defaults>
</compile_context>

<pallas_src>
import jax
import jax.numpy as jnp
from jax.experimental import pallas as pl
from jax.experimental.pallas import tpu as pltpu

_EPS = 1e-5


def _linear_block_kernel(x_ref, w1_ref, w2_ref, b_ref, out_ref):
    """One residual-block application on a VMEM tile.

    x_ref  : (N, D) f32   activations for this grid step
    w*_ref : (D, D) bf16  pre-transposed (in, out) Linear weights with the
                          preceding BatchNorm gamma folded in (VMEM-resident
                          across the whole grid: constant index_map)
    b_ref  : (2, D) f32   packed Linear biases with BatchNorm beta folded in
    out_ref: (N, D) f32
    """
    x = x_ref[...]                       # f32
    b = b_ref[...]                       # (2, D) f32
    b1 = b[0:1, :]
    b2 = b[1:2, :]

    # ---- layer 1: relu -> BN (batch stats, two-pass variance) -> Linear ----
    y = jnp.maximum(x, 0.0)
    m = jnp.mean(y, axis=0, keepdims=True)
    v = jnp.mean((y - m) ** 2, axis=0, keepdims=True)
    y = (y - m) * jax.lax.rsqrt(v + _EPS)        # gamma/beta folded into w1/b1
    # dropout(p=0.0) is identity.
    # TODO(synk): non-zero dropout would need pltpu.prng_seed / prng_random_bits.
    y = jnp.dot(y.astype(jnp.bfloat16), w1_ref[...],
                preferred_element_type=jnp.float32) + b1

    # ---- layer 2: relu -> BN (batch stats, two-pass variance) -> Linear ----
    y = jnp.maximum(y, 0.0)
    m = jnp.mean(y, axis=0, keepdims=True)
    v = jnp.mean((y - m) ** 2, axis=0, keepdims=True)
    y = (y - m) * jax.lax.rsqrt(v + _EPS)        # gamma/beta folded into w2/b2
    y = jnp.dot(y.astype(jnp.bfloat16), w2_ref[...],
                preferred_element_type=jnp.float32) + b2

    # ---- residual -----------------------------------------------------------
    out_ref[...] = x + y


def prepare_params(params, linear_size):
    """One-time host-side relayout (no per-call cost):
      * fold BN affine into the following Linear
            w' = gamma[:,None] * W^T,  b' = b + beta @ W^T
      * pre-transpose weights to (in, out),
      * cast MXU operands (weights) to bf16, keep biases in f32,
      * pack the two biases into a single (2, D) array (one fewer DMA stream).
    """
    d = linear_size

    def fuse(w, b, gamma, beta):
        wt = w.T                                   # (in, out)
        w_f = gamma[:, None] * wt                  # fold gamma into input rows
        b_f = b + beta @ wt                        # fold beta into the bias
        return w_f.astype(jnp.bfloat16), b_f.astype(jnp.float32)

    w1, b1 = fuse(params["w1"], params["b1"], params["gamma1"], params["beta1"])
    w2, b2 = fuse(params["w2"], params["b2"], params["gamma2"], params["beta2"])
    # TODO(synk): for large D, lane-align these here (128 on v5e, 256 on
    # v6e/v7x); pointless padding at D=32.
    return {"w1": w1, "w2": w2, "b": jnp.stack([b1, b2], axis=0), "d": d}


def linear_block(x, fused):
    """Apply the residual block.

    x: (N, D) for a single application, or (L, N, D) for L independent
       applications (e.g. L batches) processed in a single pallas_call.
       BN batch statistics are computed per application, matching L
       independent forward() calls of the PyTorch module.
    fused: output of prepare_params.
    """
    squeeze = x.ndim == 2
    if squeeze:
        x = x[None]
    l, n, d = x.shape
    assert d == fused["d"]

    out = pl.pallas_call(
        _linear_block_kernel,
        out_shape=jax.ShapeDtypeStruct((l, n, d), jnp.float32),
        grid_spec=pltpu.PrefetchScalarGridSpec(
            num_scalar_prefetch=0,
            grid=(l,),
            in_specs=[
                # activations: one (N, D) slice per grid step (leading dim squeezed)
                pl.BlockSpec((None, n, d), lambda i: (i, 0, 0)),
                # weights & packed biases: constant index_map -> DMA'd once,
                # VMEM-resident across all L grid iterations
                pl.BlockSpec((d, d), lambda i: (0, 0)),
                pl.BlockSpec((d, d), lambda i: (0, 0)),
                pl.BlockSpec((2, d), lambda i: (0, 0)),
            ],
            out_specs=pl.BlockSpec((None, n, d), lambda i: (i, 0, 0)),
        ),
        compiler_params=pltpu.CompilerParams(
            # L applications are independent -> shard across v7x's 2 TCs.
            dimension_semantics=("parallel",),
            # Working set here is tiny (< a few hundred KiB); default scoped
            # VMEM limit is sufficient on v5e/v6e/v7x, so no override.
        ),
    )(x, fused["w1"], fused["w2"], fused["b"])

    return out[0] if squeeze else out


def init_params(key, linear_size):
    """PyTorch-default init: nn.Linear U(-1/sqrt(fan_in), 1/sqrt(fan_in)),
    nn.BatchNorm1d gamma=1, beta=0.  Stored in PyTorch layout (W: (out, in))."""
    d = linear_size
    k1, k2, k3, k4 = jax.random.split(key, 4)
    bound = 1.0 / jnp.sqrt(jnp.float32(d))
    return {
        "w1": jax.random.uniform(k1, (d, d), jnp.float32, -bound, bound),
        "b1": jax.random.uniform(k2, (d,), jnp.float32, -bound, bound),
        "w2": jax.random.uniform(k3, (d, d), jnp.float32, -bound, bound),
        "b2": jax.random.uniform(k4, (d,), jnp.float32, -bound, bound),
        "gamma1": jnp.ones((d,), jnp.float32),
        "beta1": jnp.zeros((d,), jnp.float32),
        "gamma2": jnp.ones((d,), jnp.float32),
        "beta2": jnp.zeros((d,), jnp.float32),
    }


def _reference_f32(x, p):
    """Pure-JAX, full-f32 reference of the original module (training-mode BN)."""
    y = jnp.maximum(x, 0.0)
    m = jnp.mean(y, axis=0, keepdims=True)
    v = jnp.mean((y - m) ** 2, axis=0, keepdims=True)
    y = (y - m) / jnp.sqrt(v + _EPS) * p["gamma1"] + p["beta1"]
    y = y @ p["w1"].T + p["b1"]
    y = jnp.maximum(y, 0.0)
    m = jnp.mean(y, axis=0, keepdims=True)
    v = jnp.mean((y - m) ** 2, axis=0, keepdims=True)
    y = (y - m) / jnp.sqrt(v + _EPS) * p["gamma2"] + p["beta2"]
    y = y @ p["w2"].T + p["b2"]
    return x + y


if __name__ == "__main__":
    key = jax.random.PRNGKey(0)
    k_x, k_p = jax.random.split(key)

    stack = 4          # L independent residual-block applications in ONE launch
    batch = 8
    linear_size = 32

    x = jax.random.normal(k_x, (stack, batch, linear_size), jnp.float32)
    params = init_params(k_p, linear_size)
    fused = prepare_params(params, linear_size)

    # Stacked (amortized) path.
    out = jax.block_until_ready(linear_block(x, fused))
    ref = jax.block_until_ready(
        jax.vmap(lambda xs: _reference_f32(xs, params))(x))

    assert out.shape == x.shape
    err = float(jnp.max(jnp.abs(out - ref)))
    # bf16 MXU operands with f32 accumulation -> expect ~1e-2 absolute error
    # against the full-f32 reference.
    assert err < 5e-2, f"mismatch vs f32 reference (stacked): max abs err {err}"

    # Single-batch (2-D) path preserves the exact module calling convention.
    out1 = jax.block_until_ready(linear_block(x[0], fused))
    err1 = float(jnp.max(jnp.abs(out1 - ref[0])))
    assert err1 < 5e-2, f"mismatch vs f32 reference (single): max abs err {err1}"

    print("KERNEL_OK")
</pallas_src>

<mosaic_0001>
module attributes {stable_mosaic.version = 11 : i64} {
  func.func @_linear_block_kernel(%arg0: i32, %arg1: memref<1x8x32xf32, #tpu.memory_space<vmem>>, %arg2: memref<32x32xbf16, #tpu.memory_space<vmem>>, %arg3: memref<32x32xbf16, #tpu.memory_space<vmem>>, %arg4: memref<2x32xf32, #tpu.memory_space<vmem>>, %arg5: memref<1x8x32xf32, #tpu.memory_space<vmem>>) attributes {dimension_semantics = [#tpu.dimension_semantics<parallel>], iteration_bounds = array<i64: 4>, scalar_prefetch = 0 : i64, scratch_operands = 0 : i64, tpu.core_type = #tpu.core_type<tc>, window_params = [{transform_indices = @transform_0, window_bounds = array<i64: 1, 8, 32>}, {pipeline_mode = #tpu.pipeline_mode<synchronous>, transform_indices = @transform_1, window_bounds = array<i64: 32, 32>}, {pipeline_mode = #tpu.pipeline_mode<synchronous>, transform_indices = @transform_2, window_bounds = array<i64: 32, 32>}, {pipeline_mode = #tpu.pipeline_mode<synchronous>, transform_indices = @transform_3, window_bounds = array<i64: 2, 32>}, {transform_indices = @transform_4, window_bounds = array<i64: 1, 8, 32>}]} {
    %c0 = arith.constant 0 : index
    %c0_0 = arith.constant 0 : index
    %c0_1 = arith.constant 0 : index
    %0 = vector.load %arg1[%c0, %c0_0, %c0_1] : memref<1x8x32xf32, #tpu.memory_space<vmem>>, vector<1x8x32xf32>
    %1 = vector.shape_cast %0 : vector<1x8x32xf32> to vector<8x32xf32>
    %c0_2 = arith.constant 0 : index
    %c0_3 = arith.constant 0 : index
    %2 = vector.load %arg4[%c0_2, %c0_3] : memref<2x32xf32, #tpu.memory_space<vmem>>, vector<2x32xf32>
    %3 = vector.extract_strided_slice %2 {offsets = [0, 0], sizes = [1, 32], strides = [1, 1]} : vector<2x32xf32> to vector<1x32xf32>
    %4 = vector.extract_strided_slice %2 {offsets = [1, 0], sizes = [1, 32], strides = [1, 1]} : vector<2x32xf32> to vector<1x32xf32>
    %cst = arith.constant 0.000000e+00 : f32
    %5 = vector.broadcast %cst : f32 to vector<8x32xf32>
    %6 = arith.maximumf %1, %5 : vector<8x32xf32>
    %cst_4 = arith.constant dense<0.000000e+00> : vector<32xf32>
    %7 = vector.multi_reduction <add>, %6, %cst_4 [0] : vector<8x32xf32> to vector<32xf32>
    %8 = vector.shape_cast %7 : vector<32xf32> to vector<1x32xf32>
    %cst_5 = arith.constant 8.000000e+00 : f32
    %9 = vector.broadcast %cst_5 : f32 to vector<1x32xf32>
    %10 = arith.divf %8, %9 : vector<1x32xf32>
    %11 = vector.broadcast %10 : vector<1x32xf32> to vector<8x32xf32>
    %12 = arith.subf %6, %11 : vector<8x32xf32>
    %13 = arith.mulf %12, %12 : vector<8x32xf32>
    %cst_6 = arith.constant dense<0.000000e+00> : vector<32xf32>
    %14 = vector.multi_reduction <add>, %13, %cst_6 [0] : vector<8x32xf32> to vector<32xf32>
    %15 = vector.shape_cast %14 : vector<32xf32> to vector<1x32xf32>
    %cst_7 = arith.constant 8.000000e+00 : f32
    %16 = vector.broadcast %cst_7 : f32 to vector<1x32xf32>
    %17 = arith.divf %15, %16 : vector<1x32xf32>
    %18 = vector.broadcast %10 : vector<1x32xf32> to vector<8x32xf32>
    %19 = arith.subf %6, %18 : vector<8x32xf32>
    %cst_8 = arith.constant 9.99999974E-6 : f32
    %20 = vector.broadcast %cst_8 : f32 to vector<1x32xf32>
    %21 = arith.addf %17, %20 : vector<1x32xf32>
    %22 = math.rsqrt %21 : vector<1x32xf32>
    %23 = vector.broadcast %22 : vector<1x32xf32> to vector<8x32xf32>
    %24 = arith.mulf %19, %23 : vector<8x32xf32>
    %25 = arith.truncf %24 : vector<8x32xf32> to vector<8x32xbf16>
    %c0_9 = arith.constant 0 : index
    %c0_10 = arith.constant 0 : index
    %26 = vector.load %arg2[%c0_9, %c0_10] : memref<32x32xbf16, #tpu.memory_space<vmem>>, vector<32x32xbf16>
    %cst_11 = arith.constant dense<0.000000e+00> : vector<8x32xf32>
    %27 = tpu.matmul %25, %26, %cst_11 {dimension_numbers = #tpu.dot_dimension_numbers<[1], [0], [0], [1], [0, 0, 1, 1], [], []>} : vector<8x32xbf16>, vector<32x32xbf16>, vector<8x32xf32> -> vector<8x32xf32>
    %28 = vector.broadcast %3 : vector<1x32xf32> to vector<8x32xf32>
    %29 = arith.addf %27, %28 : vector<8x32xf32>
    %cst_12 = arith.constant 0.000000e+00 : f32
    %30 = vector.broadcast %cst_12 : f32 to vector<8x32xf32>
    %31 = arith.maximumf %29, %30 : vector<8x32xf32>
    %cst_13 = arith.constant dense<0.000000e+00> : vector<32xf32>
    %32 = vector.multi_reduction <add>, %31, %cst_13 [0] : vector<8x32xf32> to vector<32xf32>
    %33 = vector.shape_cast %32 : vector<32xf32> to vector<1x32xf32>
    %cst_14 = arith.constant 8.000000e+00 : f32
    %34 = vector.broadcast %cst_14 : f32 to vector<1x32xf32>
    %35 = arith.divf %33, %34 : vector<1x32xf32>
    %36 = vector.broadcast %35 : vector<1x32xf32> to vector<8x32xf32>
    %37 = arith.subf %31, %36 : vector<8x32xf32>
    %38 = arith.mulf %37, %37 : vector<8x32xf32>
    %cst_15 = arith.constant dense<0.000000e+00> : vector<32xf32>
    %39 = vector.multi_reduction <add>, %38, %cst_15 [0] : vector<8x32xf32> to vector<32xf32>
    %40 = vector.shape_cast %39 : vector<32xf32> to vector<1x32xf32>
    %cst_16 = arith.constant 8.000000e+00 : f32
    %41 = vector.broadcast %cst_16 : f32 to vector<1x32xf32>
    %42 = arith.divf %40, %41 : vector<1x32xf32>
    %43 = vector.broadcast %35 : vector<1x32xf32> to vector<8x32xf32>
    %44 = arith.subf %31, %43 : vector<8x32xf32>
    %cst_17 = arith.constant 9.99999974E-6 : f32
    %45 = vector.broadcast %cst_17 : f32 to vector<1x32xf32>
    %46 = arith.addf %42, %45 : vector<1x32xf32>
    %47 = math.rsqrt %46 : vector<1x32xf32>
    %48 = vector.broadcast %47 : vector<1x32xf32> to vector<8x32xf32>
    %49 = arith.mulf %44, %48 : vector<8x32xf32>
    %50 = arith.truncf %49 : vector<8x32xf32> to vector<8x32xbf16>
    %c0_18 = arith.constant 0 : index
    %c0_19 = arith.constant 0 : index
    %51 = vector.load %arg3[%c0_18, %c0_19] : memref<32x32xbf16, #tpu.memory_space<vmem>>, vector<32x32xbf16>
    %cst_20 = arith.constant dense<0.000000e+00> : vector<8x32xf32>
    %52 = tpu.matmul %50, %51, %cst_20 {dimension_numbers = #tpu.dot_dimension_numbers<[1], [0], [0], [1], [0, 0, 1, 1], [], []>} : vector<8x32xbf16>, vector<32x32xbf16>, vector<8x32xf32> -> vector<8x32xf32>
    %53 = vector.broadcast %4 : vector<1x32xf32> to vector<8x32xf32>
    %54 = arith.addf %52, %53 : vector<8x32xf32>
    %55 = arith.addf %1, %54 : vector<8x32xf32>
    %c0_21 = arith.constant 0 : index
    %c0_22 = arith.constant 0 : index
    %c0_23 = arith.constant 0 : index
    %56 = vector.load %arg5[%c0_21, %c0_22, %c0_23] : memref<1x8x32xf32, #tpu.memory_space<vmem>>, vector<1x8x32xf32>
    %57 = vector.shape_cast %56 : vector<1x8x32xf32> to vector<8x32xf32>
    %58 = vector.shape_cast %55 : vector<8x32xf32> to vector<1x8x32xf32>
    tpu.vector_store %arg5[%c0_21, %c0_22, %c0_23], %58 {strides = array<i32>} : memref<1x8x32xf32, #tpu.memory_space<vmem>>, vector<1x8x32xf32>,
    return
  }
  func.func @transform_0(%arg0: i32) -> (i32, i32, i32) {
    %c0_i32 = arith.constant 0 : i32
    %c0_i32_0 = arith.constant 0 : i32
    %c0_i32_1 = arith.constant 0 : i32
    return %arg0, %c0_i32, %c0_i32_0 : i32, i32, i32
  }
  func.func @transform_1(%arg0: i32) -> (i32, i32) {
    %c0_i32 = arith.constant 0 : i32
    %c0_i32_0 = arith.constant 0 : i32
    %c0_i32_1 = arith.constant 0 : i32
    return %c0_i32, %c0_i32_0 : i32, i32
  }
  func.func @transform_2(%arg0: i32) -> (i32, i32) {
    %c0_i32 = arith.constant 0 : i32
    %c0_i32_0 = arith.constant 0 : i32
    %c0_i32_1 = arith.constant 0 : i32
    return %c0_i32, %c0_i32_0 : i32, i32
  }
  func.func @transform_3(%arg0: i32) -> (i32, i32) {
    %c0_i32 = arith.constant 0 : i32
    %c0_i32_0 = arith.constant 0 : i32
    %c0_i32_1 = arith.constant 0 : i32
    return %c0_i32, %c0_i32_0 : i32, i32
  }
  func.func @transform_4(%arg0: i32) -> (i32, i32, i32) {
    %c0_i32 = arith.constant 0 : i32
    %c0_i32_0 = arith.constant 0 : i32
    %c0_i32_1 = arith.constant 0 : i32
    return %arg0, %c0_i32, %c0_i32_0 : i32, i32, i32
  }
}

</mosaic_0001>

<llo_original>
// kernel: tpu_custom_call.1
$region0: #{tpu_custom_call.1}
  #allocation0 [shape = 'u32[]', space=smem, size = 0x4, offset = 0x4, fixed_abs, tag = 'smem constant byte address 0x4 - core index']
  #allocation1 [shape = 'u32[72,128]{1,0:T(1,128)}', space=vmem, size = 0x9000, scoped, tag = 'internal scratch']
  %s0 = inlined_call_operand.hbm [shape: f32[4,8,32], index: 0, kind: input, shape index: {}]
  %s1 = inlined_call_operand.hbm [shape: bf16[32,32], index: 1, kind: input, shape index: {}]
  %s2 = inlined_call_operand.hbm [shape: bf16[32,32], index: 2, kind: input, shape index: {}]
  %s3 = inlined_call_operand.vmem [shape: f32[2,32], index: 3, kind: input, shape index: {}]
  %s4 = inlined_call_operand.hbm [shape: f32[4,8,32], index: 4, kind: output, shape index: {}]
  %s5 = sld [smem:[#allocation0]]
  $region61: #{tpu_custom_call.1} parent=0
    _
  %s7 = ssub.s32 1, %s5
  %s8 = scalar_select 0, %s7, %s5
  $region1: #{tpu_custom_call.1} parent=0
    #allocation2 [shape = 'u8[8192]{0}', space=vmem, size = 0x2000, scoped, tag = 'input window, operand 0']
    #allocation3 [shape = 's32[2]{0}', space=sflag, size = 0x8, scoped, tag = 'scoped memory for tpu_custom_call.1']
    #allocation4 [shape = 's32[2]{0}', space=sflag, size = 0x8, scoped, tag = 'scoped memory for tpu_custom_call.1']
    #allocation5 [shape = 'u8[8192]{0}', space=vmem, size = 0x2000, scoped, tag = 'input window, operand 1, single buffered']
    #allocation6 [shape = 's32[1]{0}', space=sflag, size = 0x4, scoped, tag = 'scoped memory for tpu_custom_call.1']
    #allocation7 [shape = 'u8[8192]{0}', space=vmem, size = 0x2000, scoped, tag = 'input window, operand 2, single buffered']
    #allocation8 [shape = 'u8[8192]{0}', space=vmem, size = 0x2000, scoped, tag = 'output window, operand 0']
    %9 = vsyncpa [#allocation3], 0
    %s10 = scalar_lea.sflag [#allocation3], 1
    %11 = vsyncpa %s10, 0
    %12 = vsyncpa [#allocation6], 0
    %13 = vsyncpa [#allocation4], 0
    %s14 = scalar_lea.sflag [#allocation4], 1
    %15 = vsyncpa %s14, 0
    loop: start=0, step=1, limit=6
    $region2: #{tpu_custom_call.1} parent=1 // loop_pre_header
      _
    $region3: #{tpu_custom_call.1} parent=1 // loop_header
      %s17 = sphi 0, %s21
      %p18 = scmp.ge.s32.totalorder %s17, 6
      %s27 = sphi 0, %s29
      %s30 = sphi 0, %s27
      %s31 = sphi 0, %s30
      %s47 = sphi 0, %s31
      %s51 = sphi 0, %s51
      %s53 = sphi 0, %s51
      %s54 = sphi 0, %s53
      %s68 = sphi 0, %s54
      %s72 = sphi 0, %s72
      %s74 = sphi 0, %s72
      %s75 = sphi 0, %s74
      %s89 = sphi 0, %s75
      %s93 = sphi 0, %s93
      %s95 = sphi 0, %s93
      %s96 = sphi 0, %s95
      %s110 = sphi 0, %s96
      %s116 = sphi 0, %s118
      %s119 = sphi 0, %s116
      %s120 = sphi 0, %s119
      %s136 = sphi 0, %s120
    $region4: #{tpu_custom_call.1} parent=1 // loop_header_branch
      %20 = sbr.rel (%p18) target = $region8
    $region5: #{tpu_custom_call.1} parent=1 // loop_body
      %s22 = ssub.s32 %s17, 1
      %s23 = ssub.s32 %s17, 2
      %s24 = sadd.s32 %s17, 1
      %s25 = ssub.s32 %s17, %s24
      %p26 = scmp.eq.s32.totalorder %s25, 0
      %s28 = sadd.s32 %s27, 1
      %s29 = scalar_select %p26, %s27, %s28
      %p32 = pneg %p26
      %p33 = scmp.eq.s32.totalorder %s17, 3
      %p34 = por %p32, %p33
      %p35 = scmp.ne.s32.totalorder %s27, %s30
      %p36 = scmp.eq.s32.totalorder %s17, 0
      %p37 = por %p35, %p36
      %p38 = scmp.ne.s32.totalorder %s27, %s30
      %p39 = scmp.eq.s32.totalorder %s22, 3
      %p40 = por %p38, %p39
      %p41 = scmp.ne.s32.totalorder %s30, %s31
      %p42 = scmp.eq.s32.totalorder %s22, 0
      %p43 = por %p41, %p42
      %p44 = scmp.ne.s32.totalorder %s30, %s31
      %p45 = scmp.eq.s32.totalorder %s23, 3
      %p46 = por %p44, %p45
      %p48 = scmp.ne.s32.totalorder %s31, %s47
      %p49 = scmp.eq.s32.totalorder %s23, 0
      %p50 = por %p48, %p49
      %s52 = sadd.s32 %s51, 1
      %p55 = scmp.eq.s32.totalorder %s17, 3
      %p56 = scmp.ne.s32.totalorder %s51, %s53
      %p57 = scmp.eq.s32.totalorder %s17, 0
      %p58 = por %p56, %p57
      %p59 = scmp.ne.s32.totalorder %s51, %s53
      %p60 = scmp.eq.s32.totalorder %s22, 3
      %p61 = por %p59, %p60
      %p62 = scmp.ne.s32.totalorder %s53, %s54
      %p63 = scmp.eq.s32.totalorder %s22, 0
      %p64 = por %p62, %p63
      %p65 = scmp.ne.s32.totalorder %s53, %s54
      %p66 = scmp.eq.s32.totalorder %s23, 3
      %p67 = por %p65, %p66
      %p69 = scmp.ne.s32.totalorder %s54, %s68
      %p70 = scmp.eq.s32.totalorder %s23, 0
      %p71 = por %p69, %p70
      %s73 = sadd.s32 %s72, 1
      %p76 = scmp.eq.s32.totalorder %s17, 3
      %p77 = scmp.ne.s32.totalorder %s72, %s74
      %p78 = scmp.eq.s32.totalorder %s17, 0
      %p79 = por %p77, %p78
      %p80 = scmp.ne.s32.totalorder %s72, %s74
      %p81 = scmp.eq.s32.totalorder %s22, 3
      %p82 = por %p80, %p81
      %p83 = scmp.ne.s32.totalorder %s74, %s75
      %p84 = scmp.eq.s32.totalorder %s22, 0
      %p85 = por %p83, %p84
      %p86 = scmp.ne.s32.totalorder %s74, %s75
      %p87 = scmp.eq.s32.totalorder %s23, 3
      %p88 = por %p86, %p87
      %p90 = scmp.ne.s32.totalorder %s75, %s89
      %p91 = scmp.eq.s32.totalorder %s23, 0
      %p92 = por %p90, %p91
      %s94 = sadd.s32 %s93, 1
      %p97 = scmp.eq.s32.totalorder %s17, 3
      %p98 = scmp.ne.s32.totalorder %s93, %s95
      %p99 = scmp.eq.s32.totalorder %s17, 0
      %p100 = por %p98, %p99
      %p101 = scmp.ne.s32.totalorder %s93, %s95
      %p102 = scmp.eq.s32.totalorder %s22, 3
      %p103 = por %p101, %p102
      %p104 = scmp.ne.s32.totalorder %s95, %s96
      %p105 = scmp.eq.s32.totalorder %s22, 0
      %p106 = por %p104, %p105
      %p107 = scmp.ne.s32.totalorder %s95, %s96
      %p108 = scmp.eq.s32.totalorder %s23, 3
      %p109 = por %p107, %p108
      %p111 = scmp.ne.s32.totalorder %s96, %s110
      %p112 = scmp.eq.s32.totalorder %s23, 0
      %p113 = por %p111, %p112
      %s114 = ssub.s32 %s17, %s24
      %p115 = scmp.eq.s32.totalorder %s114, 0
      %s117 = sadd.s32 %s116, 1
      %s118 = scalar_select %p115, %s116, %s117
      %p121 = pneg %p115
      %p122 = scmp.eq.s32.totalorder %s17, 3
      %p123 = por %p121, %p122
      %p124 = scmp.ne.s32.totalorder %s116, %s119
      %p125 = scmp.eq.s32.totalorder %s17, 0
      %p126 = por %p124, %p125
      %p127 = scmp.ne.s32.totalorder %s116, %s119
      %p128 = scmp.eq.s32.totalorder %s22, 3
      %p129 = por %p127, %p128
      %p130 = scmp.ne.s32.totalorder %s119, %s120
      %p131 = scmp.eq.s32.totalorder %s22, 0
      %p132 = por %p130, %p131
      %p133 = scmp.ne.s32.totalorder %s119, %s120
      %p134 = scmp.eq.s32.totalorder %s23, 3
      %p135 = por %p133, %p134
      %p137 = scmp.ne.s32.totalorder %s120, %s136
      %p138 = scmp.eq.s32.totalorder %s23, 0
      %p139 = por %p137, %p138
      %p140 = scmp.le.s32.totalorder 1, %s17
      %p141 = scmp.lt.s32.totalorder %s17, 5
      %p142 = pnand %p140, %p141
      %p143 = pneg %p142
      // Predicated region
      $region9: #{tpu_custom_call.1} parent=5 // pred_check
        _
      $region10: #{tpu_custom_call.1} parent=5 // pred_check_branch
        %145 = sbr.rel (%p142) target = $region12
      $region11: #{tpu_custom_call.1} parent=5 // pred_region
        %s146 = ssub.s32 %s17, 1
        // Predicated region
        $region13: #{tpu_custom_call.1} parent=11 // pred_check
          %p147 = pneg %p64
        $region14: #{tpu_custom_call.1} parent=11 // pred_check_branch
          %149 = sbr.rel (%p147) target = $region16
        $region15: #{tpu_custom_call.1} parent=11 // pred_region
          %151 = vsyncadd [#allocation6], 0
          %s152 = sshll.u32 %s1, 4
          %s153 = int_to_ptr.hbm [resolvable:$true] %s152
          %s154 = sshll.u32 [#allocation5], 4
          %s155 = int_to_ptr.vmem [resolvable:$true] %s154
          %160 = dma.hbm_to_vmem [thread:$0]  %s153, 256, %s155, [#allocation6], 64, 64, 4
        $region16: #{tpu_custom_call.1} parent=11 // pred_fallthru
          _
        // Predicated region
        $region17: #{tpu_custom_call.1} parent=11 // pred_check
          %p161 = pneg %p85
        $region18: #{tpu_custom_call.1} parent=11 // pred_check_branch
          %163 = sbr.rel (%p161) target = $region20
        $region19: #{tpu_custom_call.1} parent=11 // pred_region
          %165 = vsyncadd [#allocation6], 0
          %s166 = sshll.u32 %s2, 4
          %s167 = int_to_ptr.hbm [resolvable:$true] %s166
          %s168 = sshll.u32 [#allocation7], 4
          %s169 = int_to_ptr.vmem [resolvable:$true] %s168
          %174 = dma.hbm_to_vmem [thread:$0]  %s167, 256, %s169, [#allocation6], 64, 64, 4
        $region20: #{tpu_custom_call.1} parent=11 // pred_fallthru
          _
        // Predicated region
        $region21: #{tpu_custom_call.1} parent=11 // pred_check
          %p175 = pneg %p106
        $region22: #{tpu_custom_call.1} parent=11 // pred_check_branch
          %177 = sbr.rel (%p175) target = $region24
        $region23: #{tpu_custom_call.1} parent=11 // pred_region
          _
        $region24: #{tpu_custom_call.1} parent=11 // pred_fallthru
          _
      $region12: #{tpu_custom_call.1} parent=5 // pred_fallthru
        _
      %p178 = scmp.lt.s32.totalorder %s17, 4
      // Predicated region
      $region25: #{tpu_custom_call.1} parent=5 // pred_check
        %p179 = pneg %p178
      $region26: #{tpu_custom_call.1} parent=5 // pred_check_branch
        %181 = sbr.rel (%p179) target = $region28
      $region27: #{tpu_custom_call.1} parent=5 // pred_region
        // Predicated region
        $region29: #{tpu_custom_call.1} parent=27 // pred_check
          %p182 = pneg %p37
        $region30: #{tpu_custom_call.1} parent=27 // pred_check_branch
          %184 = sbr.rel (%p182) target = $region32
        $region31: #{tpu_custom_call.1} parent=27 // pred_region
          %s185 = sand.u32 %s27, 1
          %s186 = scalar_lea.sflag [#allocation3], %s185
          %s187 = sand.u32 %s27, 1
          %s188 = smul.addr %s187, 8
          %s189 = scalar_lea.vmem [#allocation2], %s188
          %191 = vsyncadd %s186, 0
          %s192 = smul.addr %s17, 8
          %s193 = scalar_lea.hbm %s0, %s192
          %s195 = sshll.u32 %s193, 4
          %s196 = int_to_ptr.hbm [resolvable:$true] %s195
          %s197 = sshll.u32 %s189, 4
          %s198 = int_to_ptr.vmem [resolvable:$true] %s197
          %200 = dma.hbm_to_vmem [thread:$0]  %s196, 128, %s198, %s186
        $region32: #{tpu_custom_call.1} parent=27 // pred_fallthru
          _
      $region28: #{tpu_custom_call.1} parent=5 // pred_fallthru
        _
      %p201 = scmp.le.s32.totalorder 1, %s17
      %p202 = scmp.lt.s32.totalorder %s17, 5
      %p203 = pnand %p201, %p202
      %p204 = pneg %p203
      // Predicated region
      $region33: #{tpu_custom_call.1} parent=5 // pred_check
        _
      $region34: #{tpu_custom_call.1} parent=5 // pred_check_branch
        %206 = sbr.rel (%p203) target = $region36
      $region35: #{tpu_custom_call.1} parent=5 // pred_region
        %s207 = ssub.s32 %s17, 1
        %s208 = sand.u32 %s30, 1
        %s209 = scalar_lea.sflag [#allocation3], %s208
        %s210 = sand.u32 %s30, 1
        %s211 = smul.addr %s210, 8
        %s212 = scalar_lea.vmem [#allocation2], %s211
        // Predicated region
        $region37: #{tpu_custom_call.1} parent=35 // pred_check
          %p213 = pneg %p43
        $region38: #{tpu_custom_call.1} parent=35 // pred_check_branch
          %215 = sbr.rel (%p213) target = $region40
        $region39: #{tpu_custom_call.1} parent=35 // pred_region
          %217 = dma.done %s209, 128
        $region40: #{tpu_custom_call.1} parent=35 // pred_fallthru
          _
        // Predicated region
        $region41: #{tpu_custom_call.1} parent=35 // pred_check
          %p218 = pneg %p64
        $region42: #{tpu_custom_call.1} parent=35 // pred_check_branch
          %220 = sbr.rel (%p218) target = $region44
        $region43: #{tpu_custom_call.1} parent=35 // pred_region
          %222 = dma.done [#allocation6], 256
        $region44: #{tpu_custom_call.1} parent=35 // pred_fallthru
          _
        // Predicated region
        $region45: #{tpu_custom_call.1} parent=35 // pred_check
          %p223 = pneg %p85
        $region46: #{tpu_custom_call.1} parent=35 // pred_check_branch
          %225 = sbr.rel (%p223) target = $region48
        $region47: #{tpu_custom_call.1} parent=35 // pred_region
          %227 = dma.done [#allocation6], 256
        $region48: #{tpu_custom_call.1} parent=35 // pred_fallthru
          _
        %s228 = sand.u32 %s30, 1
        %s229 = scalar_lea.sflag [#allocation3], %s228
        %s230 = sand.u32 %s30, 1
        %s231 = smul.addr %s230, 8
        %s232 = scalar_lea.vmem [#allocation2], %s231
        %p233 = pneg %p43
        %p234 = pneg %p40
        %p235 = pneg %p64
        %p236 = pneg %p61
        %p237 = pneg %p85
        %p238 = pneg %p82
        %p239 = pneg %p106
        %p240 = pneg %p103
        %p241 = pneg %p132
        %p242 = pneg %p129
        %s243 = sand.u32 %s119, 1
        %s244 = scalar_lea.sflag [#allocation4], %s243
        %s245 = sand.u32 %s119, 1
        %s246 = smul.addr %s245, 8
        %s247 = scalar_lea.vmem [#allocation8], %s246
        %v249 = vld [vmem:[%s212] sm:$0xff]
        %v250 = vld [vmem:[%s3] sm:$0x3]
        %v251 = vmax.f32 %v249, 0.0
        %vm252 = vcmask 261120
        %v253 = vsel %vm252, %v251, 0.0
        %v254 = vrot.slane %v253, 4
        %v255 = vadd.f32 %v253, %v254
        %v256 = vrot.slane %v255, 2
        %v257 = vadd.f32 %v255, %v256
        %v258 = vrot.slane %v257, 1
        %v259 = vadd.f32 %v257, %v258
        %v260 = vrcp.pop 8.0
        %v261 = vmul.f32 8.0, %v260
        %v262 = vsub.f32 1.0, %v261
        %v263 = vmul.f32 %v260, %v262
        %v264 = vadd.f32 %v260, %v263
        %vm265 = vweird.f32 %v260
        %v266 = vsel %vm265, %v260, %v264
        %v267 = vmul.f32 %v259, %v266
        %v268 = vsub.f32 %v251, %v267
        %v269 = vmul.f32 %v268, %v268
        %v270 = vsel %vm252, %v269, 0.0
        %v271 = vrot.slane %v270, 4
        %v272 = vadd.f32 %v270, %v271
        %v273 = vrot.slane %v272, 2
        %v274 = vadd.f32 %v272, %v273
        %v275 = vrot.slane %v274, 1
        %v276 = vadd.f32 %v274, %v275
        %v277 = vmul.f32 %v276, %v266
        %v278 = vadd.f32 %v277, 1e-05
        %v279 = vrsqrt.pop %v278
        %v280 = vmul.f32 %v279, %v278
        %v281 = vmul.f32 %v280, %v279
        %v282 = vmul.f32 0.5, %v281
        %v283 = vsub.f32 1.5, %v282
        %v284 = vmul.f32 %v279, %v283
        %vm285 = vweird.f32 %v278
        %vm286 = vweird.f32 %v279
        %vm287 = vmor %vm285, %vm286
        %v288 = vsel %vm287, %v279, %v284
        %v289 = vmul.f32 %v268, %v288
        %v290 = vpack.c.bf16 %v289, %v289
        %v291 = vld [vmem:[#allocation5] sm:$0xf]
        %v292 = vld [vmem:[#allocation5 + $0x4] sm:$0xf]
        %v293 = vld [vmem:[#allocation5 + $0x8] sm:$0xf]
        %v294 = vld [vmem:[#allocation5 + $0xc] sm:$0xf]
        %v295 = vperm.slane %v250, 0
        %v300 = vunpack.c.l.b16 %v291
        %v301 = vunpack.c.l.b16 %v292
        %v302 = vunpack.c.l.b16 %v293
        %v303 = vunpack.c.l.b16 %v294
        %v304 = vpack.c.b16 %v301, %v300
        %v305 = vpack.c.b16 %v303, %v302
        %v309 = vsel %vm252, %v290, 0
        %311 = vmatpush.bf16.msra.mxu0 0
        %312 = vmatpush.bf16.msra.mxu0 0
        %313 = vmatpush.bf16.msra.mxu0 0
        %314 = vmatpush.bf16.msra.mxu0 0
        %315 = vmatpush.bf16.msra.mxu0 0
        %316 = vmatpush.bf16.msra.mxu0 0
        %317 = vmatpush.bf16.msra.mxu0 %v305
        %318 = vmatpush.bf16.msra.mxu0 %v304
        %319 = vmatmul.bf16.gmra.mxu0 %v309
        %v320 = vpop.f32.mrf.mxu0
        %v321 = vadd.f32 %v295, %v320
        %v322 = vpop.f32.mrf.mxu0
        %323 = vdwg.mxu0
        %v324 = vmax.f32 %v321, 0.0
        %v325 = vsel %vm252, %v324, 0.0
        %v326 = vrot.slane %v325, 4
        %v327 = vadd.f32 %v325, %v326
        %v328 = vrot.slane %v327, 2
        %v329 = vadd.f32 %v327, %v328
        %v330 = vrot.slane %v329, 1
        %v331 = vadd.f32 %v329, %v330
        %v332 = vmul.f32 %v331, %v266
        %v333 = vsub.f32 %v324, %v332
        %v334 = vmul.f32 %v333, %v333
        %v335 = vsel %vm252, %v334, 0.0
        %v336 = vrot.slane %v335, 4
        %v337 = vadd.f32 %v335, %v336
        %v338 = vrot.slane %v337, 2
        %v339 = vadd.f32 %v337, %v338
        %v340 = vrot.slane %v339, 1
        %v341 = vadd.f32 %v339, %v340
        %v342 = vmul.f32 %v341, %v266
        %v343 = vadd.f32 %v342, 1e-05
        %v344 = vrsqrt.pop %v343
        %v345 = vmul.f32 %v344, %v343
        %v346 = vmul.f32 %v345, %v344
        %v347 = vmul.f32 0.5, %v346
        %v348 = vsub.f32 1.5, %v347
        %v349 = vmul.f32 %v344, %v348
        %vm350 = vweird.f32 %v343
        %vm351 = vweird.f32 %v344
        %vm352 = vmor %vm350, %vm351
        %v353 = vsel %vm352, %v344, %v349
        %v354 = vmul.f32 %v333, %v353
        %v355 = vpack.c.bf16 %v354, %v354
        %v356 = vld [vmem:[#allocation7] sm:$0xf]
        %v357 = vld [vmem:[#allocation7 + $0x4] sm:$0xf]
        %v358 = vld [vmem:[#allocation7 + $0x8] sm:$0xf]
        %v359 = vld [vmem:[#allocation7 + $0xc] sm:$0xf]
        %v360 = vperm.slane %v250, 1
        %v365 = vunpack.c.l.b16 %v356
        %v366 = vunpack.c.l.b16 %v357
        %v367 = vunpack.c.l.b16 %v358
        %v368 = vunpack.c.l.b16 %v359
        %v369 = vpack.c.b16 %v366, %v365
        %v370 = vpack.c.b16 %v368, %v367
        %v374 = vsel %vm252, %v355, 0
        %376 = vmatpush.bf16.msra.mxu0 0
        %377 = vmatpush.bf16.msra.mxu0 0
        %378 = vmatpush.bf16.msra.mxu0 0
        %379 = vmatpush.bf16.msra.mxu0 0
        %380 = vmatpush.bf16.msra.mxu0 0
        %381 = vmatpush.bf16.msra.mxu0 0
        %382 = vmatpush.bf16.msra.mxu0 %v370
        %383 = vmatpush.bf16.msra.mxu0 %v369
        %384 = vmatmul.bf16.gmra.mxu0 %v374
        %v385 = vpop.f32.mrf.mxu0
        %v386 = vadd.f32 %v360, %v385
        %v387 = vpop.f32.mrf.mxu0
        %388 = vdwg.mxu0
        %v389 = vadd.f32 %v249, %v386
        %390 = vst.msk [vmem:[%s247] sm:$0xff] %vm252, %v389
        %s391 = sand.u32 %s119, 1
        %s392 = scalar_lea.sflag [#allocation4], %s391
        %s393 = sand.u32 %s119, 1
        %s394 = smul.addr %s393, 8
        %s395 = scalar_lea.vmem [#allocation8], %s394
        // Predicated region
        $region49: #{tpu_custom_call.1} parent=35 // pred_check
          %p396 = pneg %p129
        $region50: #{tpu_custom_call.1} parent=35 // pred_check_branch
          %398 = sbr.rel (%p396) target = $region52
        $region51: #{tpu_custom_call.1} parent=35 // pred_region
          %400 = vsyncadd %s392, 0
          %s401 = smul.addr %s22, 8
          %s402 = scalar_lea.hbm %s4, %s401
          %s404 = sshll.u32 %s395, 4
          %s405 = int_to_ptr.vmem [resolvable:$true] %s404
          %s406 = sshll.u32 %s402, 4
          %s407 = int_to_ptr.hbm [resolvable:$true] %s406
          %409 = dma.vmem_to_hbm [thread:$0]  %s405, 128, %s407, %s392
        $region52: #{tpu_custom_call.1} parent=35 // pred_fallthru
          _
      $region36: #{tpu_custom_call.1} parent=5 // pred_fallthru
        _
      %p410 = scmp.le.s32.totalorder 2, %s17
      // Predicated region
      $region53: #{tpu_custom_call.1} parent=5 // pred_check
        %p411 = pneg %p410
      $region54: #{tpu_custom_call.1} parent=5 // pred_check_branch
        %413 = sbr.rel (%p411) target = $region56
      $region55: #{tpu_custom_call.1} parent=5 // pred_region
        %s414 = ssub.s32 %s17, 2
        // Predicated region
        $region57: #{tpu_custom_call.1} parent=55 // pred_check
          %p415 = pneg %p135
        $region58: #{tpu_custom_call.1} parent=55 // pred_check_branch
          %417 = sbr.rel (%p415) target = $region60
        $region59: #{tpu_custom_call.1} parent=55 // pred_region
          %s418 = sand.u32 %s120, 1
          %s419 = scalar_lea.sflag [#allocation4], %s418
          %s420 = sand.u32 %s120, 1
          %s421 = smul.addr %s420, 8
          %s422 = scalar_lea.vmem [#allocation8], %s421
          %424 = dma.done %s419, 128
        $region60: #{tpu_custom_call.1} parent=55 // pred_fallthru
          _
      $region56: #{tpu_custom_call.1} parent=5 // pred_fallthru
        _
    $region6: #{tpu_custom_call.1} parent=1 // loop_footer
      %s21 = sadd.s32 1, %s17
    $region7: #{tpu_custom_call.1} parent=1 // loop_footer_branch
      %16 = sbr.rel target = $region3
    $region8: #{tpu_custom_call.1} parent=1 // loop_exit
      _
    %425 = vsyncpa [#allocation3], 1
    %s426 = scalar_lea.sflag [#allocation3], 1
    %427 = vsyncpa %s426, 1
    %428 = vsyncpa [#allocation6], 1
    %429 = vsyncpa [#allocation4], 1
    %s430 = scalar_lea.sflag [#allocation4], 1
    %431 = vsyncpa %s430, 1

</llo_original>
